<compile_context>
chip_gen: v5e
topology: v5e:2x2
jax: 0.10.0
libtpu: 0.0.40
codegen_flags: <defaults>
</compile_context>

<pallas_src>
import math

import jax
import jax.numpy as jnp
from jax.experimental import pallas as pl
from jax.experimental.pallas import tpu as pltpu

# ---- problem sizes (small, consistent with the module) ----
B, S, D = 2, 8, 32           # batch, seq_len, d_model
H = 4                        # n_heads
DK = D // H                  # d_k = 8
ROPE_PCT = 0.5
D_ROPE = int(ROPE_PCT * DK)  # dims per head that get rotary encoding (= 4)
ROPE_BASE = 10000.0
BS = B * S                   # flattened rows


def _rope_tables_per_head(seq_len: int, d_k: int, d_rope: int):
    """Per-head cos/sin tables padded to d_k, plus rotate-half matrix P (d_k, d_k).

    rope(x) == x * cos + (x @ P) * sin reproduces:
      x_rope = x[..., :d_rope]; x_pass = x[..., d_rope:]
      neg_half = cat([-x_rope[..., d/2:], x_rope[..., :d/2]])
      out = cat([x_rope*cos + neg_half*sin, x_pass])
    """
    half = d_rope // 2
    theta = 1.0 / (ROPE_BASE ** (jnp.arange(0, d_rope, 2, dtype=jnp.float32) / d_rope))
    pos = jnp.arange(seq_len, dtype=jnp.float32)
    idx_theta = pos[:, None] * theta[None, :]                        # (S, d_rope//2)
    idx_theta2 = jnp.concatenate([idx_theta, idx_theta], axis=-1)    # (S, d_rope)
    cos_h = jnp.concatenate(
        [jnp.cos(idx_theta2), jnp.ones((seq_len, d_k - d_rope), jnp.float32)], axis=-1)
    sin_h = jnp.concatenate(
        [jnp.sin(idx_theta2), jnp.zeros((seq_len, d_k - d_rope), jnp.float32)], axis=-1)
    p = jnp.zeros((d_k, d_k), jnp.float32)
    j = jnp.arange(half)
    p = p.at[j + half, j].set(-1.0)   # rot[:, j]      = -x[:, j+half]
    p = p.at[j, j + half].set(1.0)    # rot[:, j+half] =  x[:, j]
    return cos_h, sin_h, p


# ------------------------- Pallas kernel -------------------------
def rotary_mha_kernel(x_ref, wbig_ref, bbig_ref, cs_ref, mask_ref,
                      wo_ref, bo_ref, o_ref):
    f32 = jnp.float32

    # One wide projection: (BS, 3D) @ (3D, 5D) -> (BS, 5D)
    #   columns: [q | q@P | k | k@P | v]  (q already carries the 1/sqrt(dk) scale)
    proj = jnp.dot(x_ref[...], wbig_ref[...], preferred_element_type=f32)
    proj = proj + bbig_ref[...]

    # RoPE via one full-width multiply by [cos | sin | cos | sin | 1], then pair-adds.
    roped = proj * cs_ref[...]
    q = roped[:, 0 * D:1 * D] + roped[:, 1 * D:2 * D]     # (BS, D), scaled + roped
    k = roped[:, 2 * D:3 * D] + roped[:, 3 * D:4 * D]     # (BS, D), roped
    v = roped[:, 4 * D:5 * D]                             # (BS, D)

    blkmask = mask_ref[...]                               # (H*S, D) head block mask
    wo = wo_ref[...]
    bo = bo_ref[...]

    outs = []
    for b in range(B):                                    # B = 2, static unroll
        r0 = b * S
        qb = q[r0:r0 + S, :]                              # (S, D)
        kb = k[r0:r0 + S, :]
        vb = v[r0:r0 + S, :]

        # Heads packed block-diagonally along sublanes: row h*S+i carries head h only.
        q_blk = jnp.concatenate([qb] * H, axis=0) * blkmask          # (H*S, D)

        # All-head scores in one transposed contraction (no k^T materialized):
        # s[h*S+i, j] = q_h[i] . k_h[j]
        s = jax.lax.dot_general(q_blk, kb, (((1,), (1,)), ((), ())),
                                preferred_element_type=f32)          # (H*S, S)

        # Exact, max-stabilized softmax per row (= per head, per query).
        m = jnp.max(s, axis=-1, keepdims=True)
        e = jnp.exp(s - m)
        p_attn = e / jnp.sum(e, axis=-1, keepdims=True)
        # dropout(p_attn) is identity at inference.

        # Context for all heads, restricted back to each head's lane block, then
        # pushed straight through the output projection (no lane-wise head concat).
        ctx = jnp.dot(p_attn, vb, preferred_element_type=f32) * blkmask   # (H*S, D)
        out_rows = jnp.dot(ctx, wo, preferred_element_type=f32)           # (H*S, D)

        # Sum the H sublane row-groups -> per-batch output (S, D).
        out_b = out_rows[0:S, :]
        for h in range(1, H):
            out_b = out_b + out_rows[h * S:(h + 1) * S, :]
        outs.append(out_b)

    # Single full-tile store.
    o_ref[...] = (jnp.concatenate(outs, axis=0) + bo).astype(o_ref.dtype)


# ------------------------- host-side parameter prep (runs once) -------------------------
def prepare_rotary_mha_params(params):
    """Fold scale / RoPE rotate matrix into the weights and build all constant operands."""
    wq, bq, wk, bk, wv, bv, wo, bo = params
    cos_h, sin_h, p = _rope_tables_per_head(S, DK, D_ROPE)
    p_full = jnp.kron(jnp.eye(H, dtype=jnp.float32), p)              # (D, D) block-diag

    scale = 1.0 / math.sqrt(DK)
    wq_s, bq_s = wq * scale, bq * scale                               # scale folded into q

    # Block-structured wide weight: [xq | xk | xv] @ W_big = [q | q@P | k | k@P | v]
    w_big = jnp.zeros((3 * D, 5 * D), jnp.float32)
    w_big = w_big.at[0 * D:1 * D, 0 * D:1 * D].set(wq_s)
    w_big = w_big.at[0 * D:1 * D, 1 * D:2 * D].set(wq_s @ p_full)
    w_big = w_big.at[1 * D:2 * D, 2 * D:3 * D].set(wk)
    w_big = w_big.at[1 * D:2 * D, 3 * D:4 * D].set(wk @ p_full)
    w_big = w_big.at[2 * D:3 * D, 4 * D:5 * D].set(wv)
    b_big = jnp.concatenate(
        [bq_s, bq_s @ p_full, bk, bk @ p_full, bv]).reshape(1, 5 * D)

    # cos/sin tiled across heads and batch; [cos | sin | cos | sin | 1] multiplier slab.
    cos_f = jnp.tile(cos_h, (B, H))                                   # (BS, D)
    sin_f = jnp.tile(sin_h, (B, H))                                   # (BS, D)
    cs_big = jnp.concatenate(
        [cos_f, sin_f, cos_f, sin_f, jnp.ones((BS, D), jnp.float32)], axis=-1)  # (BS, 5D)

    # Head block mask: blkmask[h*S + i, c] = 1 iff c // DK == h.
    rows = jnp.arange(H * S) // S
    cols = jnp.arange(D) // DK
    blkmask = (rows[:, None] == cols[None, :]).astype(jnp.float32)    # (H*S, D)

    return dict(w_big=w_big, b_big=b_big, cs_big=cs_big, blkmask=blkmask,
                wo=wo, bo=bo.reshape(1, D))


# ------------------------- jitted per-call wrapper -------------------------
@jax.jit
def rotary_mha(xq, xk, xv, prep):
    x_wide = jnp.concatenate(
        [xq.reshape(BS, D), xk.reshape(BS, D), xv.reshape(BS, D)], axis=-1)  # (BS, 3D)

    flops = (2 * BS * (3 * D) * (5 * D)                       # fused projection
             + B * (2 * (H * S) * D * S                       # all-head scores
                    + 2 * (H * S) * S * D                     # context
                    + 2 * (H * S) * D * D))                   # output projection
    transcendentals = B * H * S * S                           # exp
    bytes_accessed = 4 * (BS * 3 * D + 3 * D * 5 * D + 5 * D + BS * 5 * D
                          + H * S * D + D * D + D + BS * D)

    vmem = pl.BlockSpec(memory_space=pltpu.MemorySpace.VMEM)
    out = pl.pallas_call(
        rotary_mha_kernel,
        out_shape=jax.ShapeDtypeStruct((BS, D), xq.dtype),
        in_specs=[vmem] * 7,
        out_specs=vmem,
        cost_estimate=pl.CostEstimate(flops=flops,
                                      transcendentals=transcendentals,
                                      bytes_accessed=bytes_accessed),
    )(x_wide, prep["w_big"], prep["b_big"], prep["cs_big"], prep["blkmask"],
      prep["wo"], prep["bo"])
    return out.reshape(B, S, D)


# ------------------------- pure-JAX reference -------------------------
def ref_forward(xq, xk, xv, params):
    wq, bq, wk, bk, wv, bv, wo, bo = params
    cos_h, sin_h, p = _rope_tables_per_head(S, DK, D_ROPE)

    def split_heads(x):
        return x.reshape(B, S, H, DK).transpose(0, 2, 1, 3)   # (B, H, S, DK)

    q = split_heads(xq @ wq + bq)
    k = split_heads(xk @ wk + bk)
    v = split_heads(xv @ wv + bv)

    def rope(x):
        return x * cos_h + (x @ p) * sin_h

    q, k = rope(q), rope(k)
    scores = jnp.einsum("bhqd,bhkd->bhqk", q, k) / math.sqrt(DK)
    p_attn = jax.nn.softmax(scores, axis=-1)
    ctx = jnp.einsum("bhqk,bhkd->bhqd", p_attn, v)
    ctx = ctx.transpose(0, 2, 1, 3).reshape(B, S, D)
    return ctx @ wo + bo


if __name__ == "__main__":
    key = jax.random.PRNGKey(0)
    ks = jax.random.split(key, 11)
    wscale = 1.0 / math.sqrt(D)   # roughly nn.Linear's init scale, deterministic
    wq = jax.random.normal(ks[0], (D, D), jnp.float32) * wscale
    wk = jax.random.normal(ks[1], (D, D), jnp.float32) * wscale
    wv = jax.random.normal(ks[2], (D, D), jnp.float32) * wscale
    wo = jax.random.normal(ks[3], (D, D), jnp.float32) * wscale
    bq = jax.random.normal(ks[4], (D,), jnp.float32) * wscale
    bk = jax.random.normal(ks[5], (D,), jnp.float32) * wscale
    bv = jax.random.normal(ks[6], (D,), jnp.float32) * wscale
    bo = jax.random.normal(ks[7], (D,), jnp.float32) * wscale
    params = (wq, bq, wk, bk, wv, bv, wo, bo)

    xq = jax.random.normal(ks[8], (B, S, D), jnp.float32)
    xk = jax.random.normal(ks[9], (B, S, D), jnp.float32)
    xv = jax.random.normal(ks[10], (B, S, D), jnp.float32)

    prep = prepare_rotary_mha_params(params)   # once per parameter set, off hot path
    out = rotary_mha(xq, xk, xv, prep)
    jax.block_until_ready(out)

    ref = ref_forward(xq, xk, xv, params)
    assert out.shape == (B, S, D)
    err = jnp.max(jnp.abs(out - ref))
    assert jnp.allclose(out, ref, atol=5e-4, rtol=5e-4), f"max abs err = {err}"
    print("KERNEL_OK")
</pallas_src>

<mosaic_0001>
module attributes {stable_mosaic.version = 11 : i64} {
  func.func @rotary_mha_kernel(%arg0: memref<16x96xf32, #tpu.memory_space<vmem>>, %arg1: memref<96x160xf32, #tpu.memory_space<vmem>>, %arg2: memref<1x160xf32, #tpu.memory_space<vmem>>, %arg3: memref<16x160xf32, #tpu.memory_space<vmem>>, %arg4: memref<32x32xf32, #tpu.memory_space<vmem>>, %arg5: memref<32x32xf32, #tpu.memory_space<vmem>>, %arg6: memref<1x32xf32, #tpu.memory_space<vmem>>, %arg7: memref<16x32xf32, #tpu.memory_space<vmem>>) attributes {dimension_semantics = [], scalar_prefetch = 0 : i64, scratch_operands = 0 : i64, tpu.core_type = #tpu.core_type<tc>} {
    %c0 = arith.constant 0 : index
    %c0_0 = arith.constant 0 : index
    %0 = vector.load %arg0[%c0, %c0_0] : memref<16x96xf32, #tpu.memory_space<vmem>>, vector<16x96xf32>
    %c0_1 = arith.constant 0 : index
    %c0_2 = arith.constant 0 : index
    %1 = vector.load %arg1[%c0_1, %c0_2] : memref<96x160xf32, #tpu.memory_space<vmem>>, vector<96x160xf32>
    %cst = arith.constant dense<0.000000e+00> : vector<16x160xf32>
    %2 = tpu.matmul %0, %1, %cst {dimension_numbers = #tpu.dot_dimension_numbers<[1], [0], [0], [1], [0, 0, 1, 1], [], []>} : vector<16x96xf32>, vector<96x160xf32>, vector<16x160xf32> -> vector<16x160xf32>
    %c0_3 = arith.constant 0 : index
    %c0_4 = arith.constant 0 : index
    %3 = vector.load %arg2[%c0_3, %c0_4] : memref<1x160xf32, #tpu.memory_space<vmem>>, vector<1x160xf32>
    %4 = vector.broadcast %3 : vector<1x160xf32> to vector<16x160xf32>
    %5 = arith.addf %2, %4 : vector<16x160xf32>
    %c0_5 = arith.constant 0 : index
    %c0_6 = arith.constant 0 : index
    %6 = vector.load %arg3[%c0_5, %c0_6] : memref<16x160xf32, #tpu.memory_space<vmem>>, vector<16x160xf32>
    %7 = arith.mulf %5, %6 : vector<16x160xf32>
    %8 = vector.extract_strided_slice %7 {offsets = [0, 0], sizes = [16, 32], strides = [1, 1]} : vector<16x160xf32> to vector<16x32xf32>
    %9 = vector.extract_strided_slice %7 {offsets = [0, 32], sizes = [16, 32], strides = [1, 1]} : vector<16x160xf32> to vector<16x32xf32>
    %10 = arith.addf %8, %9 : vector<16x32xf32>
    %11 = vector.extract_strided_slice %7 {offsets = [0, 64], sizes = [16, 32], strides = [1, 1]} : vector<16x160xf32> to vector<16x32xf32>
    %12 = vector.extract_strided_slice %7 {offsets = [0, 96], sizes = [16, 32], strides = [1, 1]} : vector<16x160xf32> to vector<16x32xf32>
    %13 = arith.addf %11, %12 : vector<16x32xf32>
    %14 = vector.extract_strided_slice %7 {offsets = [0, 128], sizes = [16, 32], strides = [1, 1]} : vector<16x160xf32> to vector<16x32xf32>
    %c0_7 = arith.constant 0 : index
    %c0_8 = arith.constant 0 : index
    %15 = vector.load %arg4[%c0_7, %c0_8] : memref<32x32xf32, #tpu.memory_space<vmem>>, vector<32x32xf32>
    %c0_9 = arith.constant 0 : index
    %c0_10 = arith.constant 0 : index
    %16 = vector.load %arg5[%c0_9, %c0_10] : memref<32x32xf32, #tpu.memory_space<vmem>>, vector<32x32xf32>
    %c0_11 = arith.constant 0 : index
    %c0_12 = arith.constant 0 : index
    %17 = vector.load %arg6[%c0_11, %c0_12] : memref<1x32xf32, #tpu.memory_space<vmem>>, vector<1x32xf32>
    %18 = vector.extract_strided_slice %10 {offsets = [0, 0], sizes = [8, 32], strides = [1, 1]} : vector<16x32xf32> to vector<8x32xf32>
    %19 = vector.extract_strided_slice %13 {offsets = [0, 0], sizes = [8, 32], strides = [1, 1]} : vector<16x32xf32> to vector<8x32xf32>
    %20 = vector.extract_strided_slice %14 {offsets = [0, 0], sizes = [8, 32], strides = [1, 1]} : vector<16x32xf32> to vector<8x32xf32>
    %21 = tpu.concatenate %18, %18, %18, %18 in 0 : vector<8x32xf32>, vector<8x32xf32>, vector<8x32xf32>, vector<8x32xf32> -> vector<32x32xf32>
    %22 = arith.mulf %21, %15 : vector<32x32xf32>
    %cst_13 = arith.constant dense<0.000000e+00> : vector<32x8xf32>
    %23 = tpu.matmul %22, %19, %cst_13 {dimension_numbers = #tpu.dot_dimension_numbers<[1], [1], [0], [0], [0, 0, 1, 0], [], []>} : vector<32x32xf32>, vector<8x32xf32>, vector<32x8xf32> -> vector<32x8xf32>
    %cst_14 = arith.constant dense<0xFF800000> : vector<32xf32>
    %24 = vector.multi_reduction <maximumf>, %23, %cst_14 [1] : vector<32x8xf32> to vector<32xf32>
    %25 = vector.shape_cast %24 : vector<32xf32> to vector<32x1xf32>
    %26 = vector.broadcast %25 : vector<32x1xf32> to vector<32x8xf32>
    %27 = arith.subf %23, %26 : vector<32x8xf32>
    %28 = math.exp %27 : vector<32x8xf32>
    %cst_15 = arith.constant dense<0.000000e+00> : vector<32xf32>
    %29 = vector.multi_reduction <add>, %28, %cst_15 [1] : vector<32x8xf32> to vector<32xf32>
    %30 = vector.shape_cast %29 : vector<32xf32> to vector<32x1xf32>
    %31 = vector.broadcast %30 : vector<32x1xf32> to vector<32x8xf32>
    %32 = arith.divf %28, %31 : vector<32x8xf32>
    %cst_16 = arith.constant dense<0.000000e+00> : vector<32x32xf32>
    %33 = tpu.matmul %32, %20, %cst_16 {dimension_numbers = #tpu.dot_dimension_numbers<[1], [0], [0], [1], [0, 0, 1, 1], [], []>} : vector<32x8xf32>, vector<8x32xf32>, vector<32x32xf32> -> vector<32x32xf32>
    %34 = arith.mulf %33, %15 : vector<32x32xf32>
    %cst_17 = arith.constant dense<0.000000e+00> : vector<32x32xf32>
    %35 = tpu.matmul %34, %16, %cst_17 {dimension_numbers = #tpu.dot_dimension_numbers<[1], [0], [0], [1], [0, 0, 1, 1], [], []>} : vector<32x32xf32>, vector<32x32xf32>, vector<32x32xf32> -> vector<32x32xf32>
    %36 = vector.extract_strided_slice %35 {offsets = [0, 0], sizes = [8, 32], strides = [1, 1]} : vector<32x32xf32> to vector<8x32xf32>
    %37 = vector.extract_strided_slice %35 {offsets = [8, 0], sizes = [8, 32], strides = [1, 1]} : vector<32x32xf32> to vector<8x32xf32>
    %38 = arith.addf %36, %37 : vector<8x32xf32>
    %39 = vector.extract_strided_slice %35 {offsets = [16, 0], sizes = [8, 32], strides = [1, 1]} : vector<32x32xf32> to vector<8x32xf32>
    %40 = arith.addf %38, %39 : vector<8x32xf32>
    %41 = vector.extract_strided_slice %35 {offsets = [24, 0], sizes = [8, 32], strides = [1, 1]} : vector<32x32xf32> to vector<8x32xf32>
    %42 = arith.addf %40, %41 : vector<8x32xf32>
    %43 = vector.extract_strided_slice %10 {offsets = [8, 0], sizes = [8, 32], strides = [1, 1]} : vector<16x32xf32> to vector<8x32xf32>
    %44 = vector.extract_strided_slice %13 {offsets = [8, 0], sizes = [8, 32], strides = [1, 1]} : vector<16x32xf32> to vector<8x32xf32>
    %45 = vector.extract_strided_slice %14 {offsets = [8, 0], sizes = [8, 32], strides = [1, 1]} : vector<16x32xf32> to vector<8x32xf32>
    %46 = tpu.concatenate %43, %43, %43, %43 in 0 : vector<8x32xf32>, vector<8x32xf32>, vector<8x32xf32>, vector<8x32xf32> -> vector<32x32xf32>
    %47 = arith.mulf %46, %15 : vector<32x32xf32>
    %cst_18 = arith.constant dense<0.000000e+00> : vector<32x8xf32>
    %48 = tpu.matmul %47, %44, %cst_18 {dimension_numbers = #tpu.dot_dimension_numbers<[1], [1], [0], [0], [0, 0, 1, 0], [], []>} : vector<32x32xf32>, vector<8x32xf32>, vector<32x8xf32> -> vector<32x8xf32>
    %cst_19 = arith.constant dense<0xFF800000> : vector<32xf32>
    %49 = vector.multi_reduction <maximumf>, %48, %cst_19 [1] : vector<32x8xf32> to vector<32xf32>
    %50 = vector.shape_cast %49 : vector<32xf32> to vector<32x1xf32>
    %51 = vector.broadcast %50 : vector<32x1xf32> to vector<32x8xf32>
    %52 = arith.subf %48, %51 : vector<32x8xf32>
    %53 = math.exp %52 : vector<32x8xf32>
    %cst_20 = arith.constant dense<0.000000e+00> : vector<32xf32>
    %54 = vector.multi_reduction <add>, %53, %cst_20 [1] : vector<32x8xf32> to vector<32xf32>
    %55 = vector.shape_cast %54 : vector<32xf32> to vector<32x1xf32>
    %56 = vector.broadcast %55 : vector<32x1xf32> to vector<32x8xf32>
    %57 = arith.divf %53, %56 : vector<32x8xf32>
    %cst_21 = arith.constant dense<0.000000e+00> : vector<32x32xf32>
    %58 = tpu.matmul %57, %45, %cst_21 {dimension_numbers = #tpu.dot_dimension_numbers<[1], [0], [0], [1], [0, 0, 1, 1], [], []>} : vector<32x8xf32>, vector<8x32xf32>, vector<32x32xf32> -> vector<32x32xf32>
    %59 = arith.mulf %58, %15 : vector<32x32xf32>
    %cst_22 = arith.constant dense<0.000000e+00> : vector<32x32xf32>
    %60 = tpu.matmul %59, %16, %cst_22 {dimension_numbers = #tpu.dot_dimension_numbers<[1], [0], [0], [1], [0, 0, 1, 1], [], []>} : vector<32x32xf32>, vector<32x32xf32>, vector<32x32xf32> -> vector<32x32xf32>
    %61 = vector.extract_strided_slice %60 {offsets = [0, 0], sizes = [8, 32], strides = [1, 1]} : vector<32x32xf32> to vector<8x32xf32>
    %62 = vector.extract_strided_slice %60 {offsets = [8, 0], sizes = [8, 32], strides = [1, 1]} : vector<32x32xf32> to vector<8x32xf32>
    %63 = arith.addf %61, %62 : vector<8x32xf32>
    %64 = vector.extract_strided_slice %60 {offsets = [16, 0], sizes = [8, 32], strides = [1, 1]} : vector<32x32xf32> to vector<8x32xf32>
    %65 = arith.addf %63, %64 : vector<8x32xf32>
    %66 = vector.extract_strided_slice %60 {offsets = [24, 0], sizes = [8, 32], strides = [1, 1]} : vector<32x32xf32> to vector<8x32xf32>
    %67 = arith.addf %65, %66 : vector<8x32xf32>
    %68 = tpu.concatenate %42, %67 in 0 : vector<8x32xf32>, vector<8x32xf32> -> vector<16x32xf32>
    %69 = vector.broadcast %17 : vector<1x32xf32> to vector<16x32xf32>
    %70 = arith.addf %68, %69 : vector<16x32xf32>
    %c0_23 = arith.constant 0 : index
    %c0_24 = arith.constant 0 : index
    %71 = vector.load %arg7[%c0_23, %c0_24] : memref<16x32xf32, #tpu.memory_space<vmem>>, vector<16x32xf32>
    tpu.vector_store %arg7[%c0_23, %c0_24], %70 {strides = array<i32>} : memref<16x32xf32, #tpu.memory_space<vmem>>, vector<16x32xf32>,
    return
  }
}

</mosaic_0001>

<llo_original>
// kernel: rotary_mha.1
$region0: #{rotary_mha.1}
  #allocation0 [shape = 'u32[]', space=smem, size = 0x4, offset = 0x4, fixed_abs, tag = 'smem constant byte address 0x4 - core index']
  #allocation1 [shape = 'u32[72,128]{1,0:T(1,128)}', space=vmem, size = 0x9000, scoped, tag = 'internal scratch']
  %s0 = inlined_call_operand.vmem [shape: f32[16,96], index: 0, kind: input, shape index: {}]
  %s1 = inlined_call_operand.vmem [shape: f32[96,160], index: 1, kind: input, shape index: {}]
  %s2 = inlined_call_operand.vmem [shape: f32[1,160], index: 2, kind: input, shape index: {}]
  %s3 = inlined_call_operand.vmem [shape: f32[16,160], index: 3, kind: input, shape index: {}]
  %s4 = inlined_call_operand.vmem [shape: f32[32,32], index: 4, kind: input, shape index: {}]
  %s5 = inlined_call_operand.vmem [shape: f32[32,32], index: 5, kind: input, shape index: {}]
  %s6 = inlined_call_operand.vmem [shape: f32[1,32], index: 6, kind: input, shape index: {}]
  %s7 = inlined_call_operand.hbm [shape: f32[16,32], index: 7, kind: output, shape index: {}]
  %s8 = sld [smem:[#allocation0]]
  $region38: #{rotary_mha.1} parent=0
    _
  %s10 = ssub.s32 1, %s8
  %s11 = scalar_select 0, %s10, %s8
  $region1: #{rotary_mha.1} parent=0
    #allocation2 [shape = 'u8[8192]{0}', space=vmem, size = 0x2000, scoped, tag = 'output window, operand 0, single buffered']
    #allocation3 [shape = 's32[1]{0}', space=sflag, size = 0x4, scoped, tag = 'scoped memory for rotary_mha.1']
    %12 = vsyncpa [#allocation3], 0
    // Predicated region
    $region2: #{rotary_mha.1} parent=1 // pred_check
      _
    $region3: #{rotary_mha.1} parent=1 // pred_check_branch
      %14 = sbr.rel (0) target = $region5
    $region4: #{rotary_mha.1} parent=1 // pred_region
      _
    $region5: #{rotary_mha.1} parent=1 // pred_fallthru
      _
    // Predicated region
    $region6: #{rotary_mha.1} parent=1 // pred_check
      _
    $region7: #{rotary_mha.1} parent=1 // pred_check_branch
      %16 = sbr.rel (0) target = $region9
    $region8: #{rotary_mha.1} parent=1 // pred_region
      _
    $region9: #{rotary_mha.1} parent=1 // pred_fallthru
      _
    // Predicated region
    $region10: #{rotary_mha.1} parent=1 // pred_check
      _
    $region11: #{rotary_mha.1} parent=1 // pred_check_branch
      %18 = sbr.rel (0) target = $region13
    $region12: #{rotary_mha.1} parent=1 // pred_region
      _
    $region13: #{rotary_mha.1} parent=1 // pred_fallthru
      _
    // Predicated region
    $region14: #{rotary_mha.1} parent=1 // pred_check
      _
    $region15: #{rotary_mha.1} parent=1 // pred_check_branch
      %20 = sbr.rel (0) target = $region17
    $region16: #{rotary_mha.1} parent=1 // pred_region
      _
    $region17: #{rotary_mha.1} parent=1 // pred_fallthru
      _
    // Predicated region
    $region18: #{rotary_mha.1} parent=1 // pred_check
      _
    $region19: #{rotary_mha.1} parent=1 // pred_check_branch
      %22 = sbr.rel (0) target = $region21
    $region20: #{rotary_mha.1} parent=1 // pred_region
      _
    $region21: #{rotary_mha.1} parent=1 // pred_fallthru
      _
    // Predicated region
    $region22: #{rotary_mha.1} parent=1 // pred_check
      _
    $region23: #{rotary_mha.1} parent=1 // pred_check_branch
      %24 = sbr.rel (0) target = $region25
    $region24: #{rotary_mha.1} parent=1 // pred_region
      _
    $region25: #{rotary_mha.1} parent=1 // pred_fallthru
      _
    // Predicated region
    $region26: #{rotary_mha.1} parent=1 // pred_check
      _
    $region27: #{rotary_mha.1} parent=1 // pred_check_branch
      %26 = sbr.rel (0) target = $region29
    $region28: #{rotary_mha.1} parent=1 // pred_region
      _
    $region29: #{rotary_mha.1} parent=1 // pred_fallthru
      _
    %v27 = vld [vmem:[%s0] sm:$0xff]
    %v28 = vld [vmem:[%s0 + $0x8] sm:$0xff]
    %v29 = vld [vmem:[%s1] sm:$0xff]
    %v30 = vld [vmem:[%s1 + $0x8] sm:$0xff]
    %v31 = vld [vmem:[%s1 + $0x10] sm:$0xff]
    %v32 = vld [vmem:[%s1 + $0x18] sm:$0xff]
    %v33 = vld [vmem:[%s1 + $0x20] sm:$0xff]
    %v34 = vld [vmem:[%s1 + $0x28] sm:$0xff]
    %v35 = vld [vmem:[%s1 + $0x30] sm:$0xff]
    %v36 = vld [vmem:[%s1 + $0x38] sm:$0xff]
    %v37 = vld [vmem:[%s1 + $0x40] sm:$0xff]
    %v38 = vld [vmem:[%s1 + $0x48] sm:$0xff]
    %v39 = vld [vmem:[%s1 + $0x50] sm:$0xff]
    %v40 = vld [vmem:[%s1 + $0x58] sm:$0xff]
    %v41 = vld [vmem:[%s1 + $0x60] sm:$0xff]
    %v42 = vld [vmem:[%s1 + $0x68] sm:$0xff]
    %v43 = vld [vmem:[%s1 + $0x70] sm:$0xff]
    %v44 = vld [vmem:[%s1 + $0x78] sm:$0xff]
    %v45 = vld [vmem:[%s1 + $0x80] sm:$0xff]
    %v46 = vld [vmem:[%s1 + $0x88] sm:$0xff]
    %v47 = vld [vmem:[%s1 + $0x90] sm:$0xff]
    %v48 = vld [vmem:[%s1 + $0x98] sm:$0xff]
    %v49 = vld [vmem:[%s1 + $0xa0] sm:$0xff]
    %v50 = vld [vmem:[%s1 + $0xa8] sm:$0xff]
    %v51 = vld [vmem:[%s1 + $0xb0] sm:$0xff]
    %v52 = vld [vmem:[%s1 + $0xb8] sm:$0xff]
    %v53 = vld [vmem:[%s2] sm:$0x3]
    %v55 = vperm.slane %v53, 0
    %v56 = vperm.slane %v53, 1
    %vm59 = vcmask 785408
    %v61 = vsel %vm59, %v27, 0
    %v64 = vsel %vm59, %v28, 0
    %66 = vmatpush.msra.mxu0 0.0
    %67 = vmatpush.msra.mxu0 0.0
    %68 = vmatpush.msra.mxu0 0.0
    %69 = vmatpush.msra.mxu0 0.0
    %70 = vmatpush.msra.mxu0 %v51
    %71 = vmatpush.msra.mxu0 %v49
    %72 = vmatpush.msra.mxu0 %v47
    %73 = vmatpush.msra.mxu0 %v45
    %74 = vmatpush.msra.mxu0 %v43
    %75 = vmatpush.msra.mxu0 %v41
    %76 = vmatpush.msra.mxu0 %v39
    %77 = vmatpush.msra.mxu0 %v37
    %78 = vmatpush.msra.mxu0 %v35
    %79 = vmatpush.msra.mxu0 %v33
    %80 = vmatpush.msra.mxu0 %v31
    %81 = vmatpush.msra.mxu0 %v29
    %82 = vmatmul.f32.gmra.mxu0 %v61
    %v83 = vpop.f32.mrf.mxu0
    %v84 = vadd.f32 %v55, %v83
    %85 = vmatmul.f32.gmra.mxu0 %v64
    %v86 = vpop.f32.mrf.mxu0
    %v87 = vadd.f32 %v55, %v86
    %88 = vdwg.mxu0
    %89 = vmatpush.msra.mxu0 0.0
    %90 = vmatpush.msra.mxu0 0.0
    %91 = vmatpush.msra.mxu0 0.0
    %92 = vmatpush.msra.mxu0 0.0
    %93 = vmatpush.msra.mxu0 %v52
    %94 = vmatpush.msra.mxu0 %v50
    %95 = vmatpush.msra.mxu0 %v48
    %96 = vmatpush.msra.mxu0 %v46
    %97 = vmatpush.msra.mxu0 %v44
    %98 = vmatpush.msra.mxu0 %v42
    %99 = vmatpush.msra.mxu0 %v40
    %100 = vmatpush.msra.mxu0 %v38
    %101 = vmatpush.msra.mxu0 %v36
    %102 = vmatpush.msra.mxu0 %v34
    %103 = vmatpush.msra.mxu0 %v32
    %104 = vmatpush.msra.mxu0 %v30
    %105 = vmatmul.f32.gmra.mxu0 %v61
    %v106 = vpop.f32.mrf.mxu0
    %v107 = vadd.f32 %v56, %v106
    %108 = vmatmul.f32.gmra.mxu0 %v64
    %v109 = vpop.f32.mrf.mxu0
    %v110 = vadd.f32 %v56, %v109
    %111 = vdwg.mxu0
    %v112 = vld [vmem:[%s3] sm:$0xff]
    %v113 = vld [vmem:[%s3 + $0x8] sm:$0xff]
    %v114 = vld [vmem:[%s3 + $0x10] sm:$0xff]
    %v115 = vld [vmem:[%s3 + $0x18] sm:$0xff]
    %v116 = vmul.f32 %v84, %v112
    %v117 = vmul.f32 %v107, %v113
    %v118 = vmul.f32 %v87, %v114
    %v119 = vmul.f32 %v110, %v115
    %122 = vrot.lane.b32.xlu0 %v116, 96
    %v123 = vpop.permute.xlu0 %122
    %124 = vrot.lane.b32.xlu0 %v118, 96
    %v125 = vpop.permute.xlu0 %124
    %v128 = vadd.f32 %v116, %v123
    %v129 = vadd.f32 %v118, %v125
    %v130 = vld [vmem:[%s4] sm:$0xff]
    %v131 = vld [vmem:[%s4 + $0x8] sm:$0xff]
    %v132 = vld [vmem:[%s4 + $0x10] sm:$0xff]
    %v133 = vld [vmem:[%s4 + $0x18] sm:$0xff]
    %v134 = vld [vmem:[%s5] sm:$0xff]
    %v135 = vld [vmem:[%s5 + $0x8] sm:$0xff]
    %v136 = vld [vmem:[%s5 + $0x10] sm:$0xff]
    %v137 = vld [vmem:[%s5 + $0x18] sm:$0xff]
    %v138 = vld [vmem:[%s6] sm:$0x1]
    %v139 = vmul.f32 %v128, %v130
    %v140 = vmul.f32 %v128, %v131
    %v141 = vmul.f32 %v128, %v132
    %v142 = vmul.f32 %v128, %v133
    %144 = vrot.lane.b32.xlu0 %v128, 64
    %v145 = vpop.permute.xlu0 %144
    %vm146 = vcmask 261120
    %v148 = vsel %vm146, %v139, 0
    %v151 = vsel %vm146, %v140, 0
    %v154 = vsel %vm146, %v141, 0
    %v157 = vsel %vm146, %v142, 0
    %v159 = vsel %vm146, %v145, 0
    %161 = vmatpush.xpose.msra.mxu0 0.0
    %162 = vmatpush.xpose.msra.mxu0 0.0
    %163 = vmatpush.xpose.msra.mxu0 0.0
    %164 = vmatpush.xpose.msra.mxu0 0.0
    %165 = vmatpush.xpose.msra.mxu0 0.0
    %166 = vmatpush.xpose.msra.mxu0 0.0
    %167 = vmatpush.xpose.msra.mxu0 0.0
    %168 = vmatpush.xpose.msra.mxu0 0.0
    %169 = vmatpush.xpose.msra.mxu0 0.0
    %170 = vmatpush.xpose.msra.mxu0 0.0
    %171 = vmatpush.xpose.msra.mxu0 0.0
    %172 = vmatpush.xpose.msra.mxu0 0.0
    %173 = vmatpush.xpose.msra.mxu0 0.0
    %174 = vmatpush.xpose.msra.mxu0 0.0
    %175 = vmatpush.xpose.msra.mxu0 0.0
    %176 = vmatpush.xpose.msra.mxu0 %v159
    %177 = vmatmul.f32.gmra.mxu0 %v148
    %v178 = vpop.f32.mrf.mxu0
    %v179 = vadd.f32 0.0, %v178
    %180 = vmatmul.f32.gmra.mxu0 %v151
    %v181 = vpop.f32.mrf.mxu0
    %v182 = vadd.f32 0.0, %v181
    %183 = vmatmul.f32.gmra.mxu0 %v154
    %v184 = vpop.f32.mrf.mxu0
    %v185 = vadd.f32 0.0, %v184
    %186 = vmatmul.f32.gmra.mxu0 %v157
    %v187 = vpop.f32.mrf.mxu0
    %v188 = vadd.f32 0.0, %v187
    %189 = vdwg.mxu0
    %vm190 = vcmask 64512
    %v191 = vsel %vm190, %v179, -inf
    %192 = vmax.xlane.f32.xlu0 %v191
    %v193 = vpop.xlane.xlu0 %192
    %v194 = vsel %vm190, %v182, -inf
    %195 = vmax.xlane.f32.xlu0 %v194
    %v196 = vpop.xlane.xlu0 %195
    %v197 = vsel %vm190, %v185, -inf
    %198 = vmax.xlane.f32.xlu0 %v197
    %v199 = vpop.xlane.xlu0 %198
    %v200 = vsel %vm190, %v188, -inf
    %201 = vmax.xlane.f32.xlu0 %v200
    %v202 = vpop.xlane.xlu0 %201
    %v203 = vsub.f32 %v179, %v193
    %v204 = vsub.f32 %v182, %v196
    %v205 = vsub.f32 %v185, %v199
    %v206 = vsub.f32 %v188, %v202
    %v207 = vmul.f32 %v203, 1.442695
    %v208 = vpow.pop %v207
    %v209 = vmul.f32 %v204, 1.442695
    %v210 = vpow.pop %v209
    %v211 = vmul.f32 %v205, 1.442695
    %v212 = vpow.pop %v211
    %v213 = vmul.f32 %v206, 1.442695
    %v214 = vpow.pop %v213
    %v215 = vsel %vm190, %v208, 0.0
    %216 = vadd.xlane.f32.xlu0 %v215
    %v217 = vpop.xlane.xlu0 %216
    %v218 = vsel %vm190, %v210, 0.0
    %219 = vadd.xlane.f32.xlu0 %v218
    %v220 = vpop.xlane.xlu0 %219
    %v221 = vsel %vm190, %v212, 0.0
    %222 = vadd.xlane.f32.xlu0 %v221
    %v223 = vpop.xlane.xlu0 %222
    %v224 = vsel %vm190, %v214, 0.0
    %225 = vadd.xlane.f32.xlu0 %v224
    %v226 = vpop.xlane.xlu0 %225
    %v227 = vrcp.pop %v217
    %v228 = vmul.f32 %v217, %v227
    %v229 = vsub.f32 1.0, %v228
    %v230 = vmul.f32 %v227, %v229
    %v231 = vadd.f32 %v227, %v230
    %vm232 = vweird.f32 %v217
    %vm233 = vweird.f32 %v227
    %vm234 = vmor %vm232, %vm233
    %v235 = vsel %vm234, %v227, %v231
    %v236 = vand.u32 2147483647, %v217
    %vm237 = vcmp.eq.f32.partialorder %v236, 8.507059e+37
    %v238 = vand.u32 %v217, 2147483648
    %v239 = vor.u32 1.1754944e-38, %v238
    %v240 = vsel %vm237, %v239, %v235
    %v241 = vmul.f32 %v208, %v240
    %v242 = vrcp.pop %v220
    %v243 = vmul.f32 %v220, %v242
    %v244 = vsub.f32 1.0, %v243
    %v245 = vmul.f32 %v242, %v244
    %v246 = vadd.f32 %v242, %v245
    %vm247 = vweird.f32 %v220
    %vm248 = vweird.f32 %v242
    %vm249 = vmor %vm247, %vm248
    %v250 = vsel %vm249, %v242, %v246
    %v251 = vand.u32 2147483647, %v220
    %vm252 = vcmp.eq.f32.partialorder %v251, 8.507059e+37
    %v253 = vand.u32 %v220, 2147483648
    %v254 = vor.u32 1.1754944e-38, %v253
    %v255 = vsel %vm252, %v254, %v250
    %v256 = vmul.f32 %v210, %v255
    %v257 = vrcp.pop %v223
    %v258 = vmul.f32 %v223, %v257
    %v259 = vsub.f32 1.0, %v258
    %v260 = vmul.f32 %v257, %v259
    %v261 = vadd.f32 %v257, %v260
    %vm262 = vweird.f32 %v223
    %vm263 = vweird.f32 %v257
    %vm264 = vmor %vm262, %vm263
    %v265 = vsel %vm264, %v257, %v261
    %v266 = vand.u32 2147483647, %v223
    %vm267 = vcmp.eq.f32.partialorder %v266, 8.507059e+37
    %v268 = vand.u32 %v223, 2147483648
    %v269 = vor.u32 1.1754944e-38, %v268
    %v270 = vsel %vm267, %v269, %v265
    %v271 = vmul.f32 %v212, %v270
    %v272 = vrcp.pop %v226
    %v273 = vmul.f32 %v226, %v272
    %v274 = vsub.f32 1.0, %v273
    %v275 = vmul.f32 %v272, %v274
    %v276 = vadd.f32 %v272, %v275
    %vm277 = vweird.f32 %v226
    %vm278 = vweird.f32 %v272
    %vm279 = vmor %vm277, %vm278
    %v280 = vsel %vm279, %v272, %v276
    %v281 = vand.u32 2147483647, %v226
    %vm282 = vcmp.eq.f32.partialorder %v281, 8.507059e+37
    %v283 = vand.u32 %v226, 2147483648
    %v284 = vor.u32 1.1754944e-38, %v283
    %v285 = vsel %vm282, %v284, %v280
    %v286 = vmul.f32 %v214, %v285
    %v288 = vsel %vm190, %v241, 0
    %v291 = vsel %vm190, %v256, 0
    %v294 = vsel %vm190, %v271, 0
    %v297 = vsel %vm190, %v286, 0
    %299 = vmatpush.msra.mxu0 0.0
    %300 = vmatpush.msra.mxu0 0.0
    %301 = vmatpush.msra.mxu0 0.0
    %302 = vmatpush.msra.mxu0 0.0
    %303 = vmatpush.msra.mxu0 0.0
    %304 = vmatpush.msra.mxu0 0.0
    %305 = vmatpush.msra.mxu0 0.0
    %306 = vmatpush.msra.mxu0 0.0
    %307 = vmatpush.msra.mxu0 0.0
    %308 = vmatpush.msra.mxu0 0.0
    %309 = vmatpush.msra.mxu0 0.0
    %310 = vmatpush.msra.mxu0 0.0
    %311 = vmatpush.msra.mxu0 0.0
    %312 = vmatpush.msra.mxu0 0.0
    %313 = vmatpush.msra.mxu0 0.0
    %314 = vmatpush.msra.mxu0 %v117
    %315 = vmatmul.f32.gmra.mxu0 %v288
    %v316 = vpop.f32.mrf.mxu0
    %v317 = vadd.f32 0.0, %v316
    %318 = vmatmul.f32.gmra.mxu0 %v291
    %v319 = vpop.f32.mrf.mxu0
    %v320 = vadd.f32 0.0, %v319
    %321 = vmatmul.f32.gmra.mxu0 %v294
    %v322 = vpop.f32.mrf.mxu0
    %v323 = vadd.f32 0.0, %v322
    %324 = vmatmul.f32.gmra.mxu0 %v297
    %v325 = vpop.f32.mrf.mxu0
    %v326 = vadd.f32 0.0, %v325
    %327 = vdwg.mxu0
    %v328 = vmul.f32 %v317, %v130
    %v329 = vmul.f32 %v320, %v131
    %v330 = vmul.f32 %v323, %v132
    %v331 = vmul.f32 %v326, %v133
    %v333 = vsel %vm146, %v328, 0
    %v336 = vsel %vm146, %v329, 0
    %v339 = vsel %vm146, %v330, 0
    %v342 = vsel %vm146, %v331, 0
    %344 = vmatpush.msra.mxu0 0.0
    %345 = vmatpush.msra.mxu0 0.0
    %346 = vmatpush.msra.mxu0 0.0
    %347 = vmatpush.msra.mxu0 0.0
    %348 = vmatpush.msra.mxu0 0.0
    %349 = vmatpush.msra.mxu0 0.0
    %350 = vmatpush.msra.mxu0 0.0
    %351 = vmatpush.msra.mxu0 0.0
    %352 = vmatpush.msra.mxu0 0.0
    %353 = vmatpush.msra.mxu0 0.0
    %354 = vmatpush.msra.mxu0 0.0
    %355 = vmatpush.msra.mxu0 0.0
    %356 = vmatpush.msra.mxu0 %v137
    %357 = vmatpush.msra.mxu0 %v136
    %358 = vmatpush.msra.mxu0 %v135
    %359 = vmatpush.msra.mxu0 %v134
    %360 = vmatmul.f32.gmra.mxu0 %v333
    %v361 = vpop.f32.mrf.mxu0
    %v362 = vadd.f32 0.0, %v361
    %363 = vmatmul.f32.gmra.mxu0 %v336
    %v364 = vpop.f32.mrf.mxu0
    %v365 = vadd.f32 0.0, %v364
    %366 = vmatmul.f32.gmra.mxu0 %v339
    %v367 = vpop.f32.mrf.mxu0
    %v368 = vadd.f32 0.0, %v367
    %369 = vmatmul.f32.gmra.mxu0 %v342
    %v370 = vpop.f32.mrf.mxu0
    %v371 = vadd.f32 0.0, %v370
    %372 = vdwg.mxu0
    %v373 = vadd.f32 %v362, %v365
    %v374 = vadd.f32 %v373, %v368
    %v375 = vadd.f32 %v374, %v371
    %v376 = vmul.f32 %v129, %v130
    %v377 = vmul.f32 %v129, %v131
    %v378 = vmul.f32 %v129, %v132
    %v379 = vmul.f32 %v129, %v133
    %381 = vrot.lane.b32.xlu0 %v129, 64
    %v382 = vpop.permute.xlu0 %381
    %v384 = vsel %vm146, %v376, 0
    %v387 = vsel %vm146, %v377, 0
    %v390 = vsel %vm146, %v378, 0
    %v393 = vsel %vm146, %v379, 0
    %v395 = vsel %vm146, %v382, 0
    %397 = vmatpush.xpose.msra.mxu0 0.0
    %398 = vmatpush.xpose.msra.mxu0 0.0
    %399 = vmatpush.xpose.msra.mxu0 0.0
    %400 = vmatpush.xpose.msra.mxu0 0.0
    %401 = vmatpush.xpose.msra.mxu0 0.0
    %402 = vmatpush.xpose.msra.mxu0 0.0
    %403 = vmatpush.xpose.msra.mxu0 0.0
    %404 = vmatpush.xpose.msra.mxu0 0.0
    %405 = vmatpush.xpose.msra.mxu0 0.0
    %406 = vmatpush.xpose.msra.mxu0 0.0
    %407 = vmatpush.xpose.msra.mxu0 0.0
    %408 = vmatpush.xpose.msra.mxu0 0.0
    %409 = vmatpush.xpose.msra.mxu0 0.0
    %410 = vmatpush.xpose.msra.mxu0 0.0
    %411 = vmatpush.xpose.msra.mxu0 0.0
    %412 = vmatpush.xpose.msra.mxu0 %v395
    %413 = vmatmul.f32.gmra.mxu0 %v384
    %v414 = vpop.f32.mrf.mxu0
    %v415 = vadd.f32 0.0, %v414
    %416 = vmatmul.f32.gmra.mxu0 %v387
    %v417 = vpop.f32.mrf.mxu0
    %v418 = vadd.f32 0.0, %v417
    %419 = vmatmul.f32.gmra.mxu0 %v390
    %v420 = vpop.f32.mrf.mxu0
    %v421 = vadd.f32 0.0, %v420
    %422 = vmatmul.f32.gmra.mxu0 %v393
    %v423 = vpop.f32.mrf.mxu0
    %v424 = vadd.f32 0.0, %v423
    %425 = vdwg.mxu0
    %v426 = vsel %vm190, %v415, -inf
    %427 = vmax.xlane.f32.xlu0 %v426
    %v428 = vpop.xlane.xlu0 %427
    %v429 = vsel %vm190, %v418, -inf
    %430 = vmax.xlane.f32.xlu0 %v429
    %v431 = vpop.xlane.xlu0 %430
    %v432 = vsel %vm190, %v421, -inf
    %433 = vmax.xlane.f32.xlu0 %v432
    %v434 = vpop.xlane.xlu0 %433
    %v435 = vsel %vm190, %v424, -inf
    %436 = vmax.xlane.f32.xlu0 %v435
    %v437 = vpop.xlane.xlu0 %436
    %v438 = vsub.f32 %v415, %v428
    %v439 = vsub.f32 %v418, %v431
    %v440 = vsub.f32 %v421, %v434
    %v441 = vsub.f32 %v424, %v437
    %v442 = vmul.f32 %v438, 1.442695
    %v443 = vpow.pop %v442
    %v444 = vmul.f32 %v439, 1.442695
    %v445 = vpow.pop %v444
    %v446 = vmul.f32 %v440, 1.442695
    %v447 = vpow.pop %v446
    %v448 = vmul.f32 %v441, 1.442695
    %v449 = vpow.pop %v448
    %v450 = vsel %vm190, %v443, 0.0
    %451 = vadd.xlane.f32.xlu0 %v450
    %v452 = vpop.xlane.xlu0 %451
    %v453 = vsel %vm190, %v445, 0.0
    %454 = vadd.xlane.f32.xlu0 %v453
    %v455 = vpop.xlane.xlu0 %454
    %v456 = vsel %vm190, %v447, 0.0
    %457 = vadd.xlane.f32.xlu0 %v456
    %v458 = vpop.xlane.xlu0 %457
    %v459 = vsel %vm190, %v449, 0.0
    %460 = vadd.xlane.f32.xlu0 %v459
    %v461 = vpop.xlane.xlu0 %460
    %v462 = vrcp.pop %v452
    %v463 = vmul.f32 %v452, %v462
    %v464 = vsub.f32 1.0, %v463
    %v465 = vmul.f32 %v462, %v464
    %v466 = vadd.f32 %v462, %v465
    %vm467 = vweird.f32 %v452
    %vm468 = vweird.f32 %v462
    %vm469 = vmor %vm467, %vm468
    %v470 = vsel %vm469, %v462, %v466
    %v471 = vand.u32 2147483647, %v452
    %vm472 = vcmp.eq.f32.partialorder %v471, 8.507059e+37
    %v473 = vand.u32 %v452, 2147483648
    %v474 = vor.u32 1.1754944e-38, %v473
    %v475 = vsel %vm472, %v474, %v470
    %v476 = vmul.f32 %v443, %v475
    %v477 = vrcp.pop %v455
    %v478 = vmul.f32 %v455, %v477
    %v479 = vsub.f32 1.0, %v478
    %v480 = vmul.f32 %v477, %v479
    %v481 = vadd.f32 %v477, %v480
    %vm482 = vweird.f32 %v455
    %vm483 = vweird.f32 %v477
    %vm484 = vmor %vm482, %vm483
    %v485 = vsel %vm484, %v477, %v481
    %v486 = vand.u32 2147483647, %v455
    %vm487 = vcmp.eq.f32.partialorder %v486, 8.507059e+37
    %v488 = vand.u32 %v455, 2147483648
    %v489 = vor.u32 1.1754944e-38, %v488
    %v490 = vsel %vm487, %v489, %v485
    %v491 = vmul.f32 %v445, %v490
    %v492 = vrcp.pop %v458
    %v493 = vmul.f32 %v458, %v492
    %v494 = vsub.f32 1.0, %v493
    %v495 = vmul.f32 %v492, %v494
    %v496 = vadd.f32 %v492, %v495
    %vm497 = vweird.f32 %v458
    %vm498 = vweird.f32 %v492
    %vm499 = vmor %vm497, %vm498
    %v500 = vsel %vm499, %v492, %v496
    %v501 = vand.u32 2147483647, %v458
    %vm502 = vcmp.eq.f32.partialorder %v501, 8.507059e+37
    %v503 = vand.u32 %v458, 2147483648
    %v504 = vor.u32 1.1754944e-38, %v503
    %v505 = vsel %vm502, %v504, %v500
    %v506 = vmul.f32 %v447, %v505
    %v507 = vrcp.pop %v461
    %v508 = vmul.f32 %v461, %v507
    %v509 = vsub.f32 1.0, %v508
    %v510 = vmul.f32 %v507, %v509
    %v511 = vadd.f32 %v507, %v510
    %vm512 = vweird.f32 %v461
    %vm513 = vweird.f32 %v507
    %vm514 = vmor %vm512, %vm513
    %v515 = vsel %vm514, %v507, %v511
    %v516 = vand.u32 2147483647, %v461
    %vm517 = vcmp.eq.f32.partialorder %v516, 8.507059e+37
    %v518 = vand.u32 %v461, 2147483648
    %v519 = vor.u32 1.1754944e-38, %v518
    %v520 = vsel %vm517, %v519, %v515
    %v521 = vmul.f32 %v449, %v520
    %v523 = vsel %vm190, %v476, 0
    %v526 = vsel %vm190, %v491, 0
    %v529 = vsel %vm190, %v506, 0
    %v532 = vsel %vm190, %v521, 0
    %534 = vmatpush.msra.mxu0 0.0
    %535 = vmatpush.msra.mxu0 0.0
    %536 = vmatpush.msra.mxu0 0.0
    %537 = vmatpush.msra.mxu0 0.0
    %538 = vmatpush.msra.mxu0 0.0
    %539 = vmatpush.msra.mxu0 0.0
    %540 = vmatpush.msra.mxu0 0.0
    %541 = vmatpush.msra.mxu0 0.0
    %542 = vmatpush.msra.mxu0 0.0
    %543 = vmatpush.msra.mxu0 0.0
    %544 = vmatpush.msra.mxu0 0.0
    %545 = vmatpush.msra.mxu0 0.0
    %546 = vmatpush.msra.mxu0 0.0
    %547 = vmatpush.msra.mxu0 0.0
    %548 = vmatpush.msra.mxu0 0.0
    %549 = vmatpush.msra.mxu0 %v119
    %550 = vmatmul.f32.gmra.mxu0 %v523
    %v551 = vpop.f32.mrf.mxu0
    %v552 = vadd.f32 0.0, %v551
    %553 = vmatmul.f32.gmra.mxu0 %v526
    %v554 = vpop.f32.mrf.mxu0
    %v555 = vadd.f32 0.0, %v554
    %556 = vmatmul.f32.gmra.mxu0 %v529
    %v557 = vpop.f32.mrf.mxu0
    %v558 = vadd.f32 0.0, %v557
    %559 = vmatmul.f32.gmra.mxu0 %v532
    %v560 = vpop.f32.mrf.mxu0
    %v561 = vadd.f32 0.0, %v560
    %562 = vdwg.mxu0
    %v563 = vmul.f32 %v552, %v130
    %v564 = vmul.f32 %v555, %v131
    %v565 = vmul.f32 %v558, %v132
    %v566 = vmul.f32 %v561, %v133
    %v568 = vsel %vm146, %v563, 0
    %v571 = vsel %vm146, %v564, 0
    %v574 = vsel %vm146, %v565, 0
    %v577 = vsel %vm146, %v566, 0
    %579 = vmatpush.msra.mxu0 0.0
    %580 = vmatpush.msra.mxu0 0.0
    %581 = vmatpush.msra.mxu0 0.0
    %582 = vmatpush.msra.mxu0 0.0
    %583 = vmatpush.msra.mxu0 0.0
    %584 = vmatpush.msra.mxu0 0.0
    %585 = vmatpush.msra.mxu0 0.0
    %586 = vmatpush.msra.mxu0 0.0
    %587 = vmatpush.msra.mxu0 0.0
    %588 = vmatpush.msra.mxu0 0.0
    %589 = vmatpush.msra.mxu0 0.0
    %590 = vmatpush.msra.mxu0 0.0
    %591 = vmatpush.msra.mxu0 %v137
    %592 = vmatpush.msra.mxu0 %v136
    %593 = vmatpush.msra.mxu0 %v135
    %594 = vmatpush.msra.mxu0 %v134
    %595 = vmatmul.f32.gmra.mxu0 %v568
    %v596 = vpop.f32.mrf.mxu0
    %v597 = vadd.f32 0.0, %v596
    %598 = vmatmul.f32.gmra.mxu0 %v571
    %v599 = vpop.f32.mrf.mxu0
    %v600 = vadd.f32 0.0, %v599
    %601 = vmatmul.f32.gmra.mxu0 %v574
    %v602 = vpop.f32.mrf.mxu0
    %v603 = vadd.f32 0.0, %v602
    %604 = vmatmul.f32.gmra.mxu0 %v577
    %v605 = vpop.f32.mrf.mxu0
    %v606 = vadd.f32 0.0, %v605
    %607 = vdwg.mxu0
    %v608 = vadd.f32 %v597, %v600
    %v609 = vadd.f32 %v608, %v603
    %v610 = vadd.f32 %v609, %v606
    %v612 = vperm.slane %v138, 0
    %v614 = vadd.f32 %v375, %v612
    %v615 = vadd.f32 %v610, %v612
    %616 = vst.msk [vmem:[#allocation2] sm:$0xff] %vm146, %v614
    %617 = vst.msk [vmem:[#allocation2 + $0x8] sm:$0xff] %vm146, %v615
    // Predicated region
    $region30: #{rotary_mha.1} parent=1 // pred_check
      _
    $region31: #{rotary_mha.1} parent=1 // pred_check_branch
      %619 = sbr.rel (0) target = $region33
    $region32: #{rotary_mha.1} parent=1 // pred_region
      %621 = vsyncadd [#allocation3], 0
      %s622 = sshll.u32 [#allocation2], 4
      %s623 = int_to_ptr.vmem [resolvable:$true] %s622
      %s624 = sshll.u32 %s7, 4
      %s625 = int_to_ptr.hbm [resolvable:$true] %s624
      %630 = dma.vmem_to_hbm [thread:$0]  %s623, 256, %s625, [#allocation3], 128, 128, 8
    $region33: #{rotary_mha.1} parent=1 // pred_fallthru
      _
    // Predicated region
    $region34: #{rotary_mha.1} parent=1 // pred_check
      _
    $region35: #{rotary_mha.1} parent=1 // pred_check_branch
      %632 = sbr.rel (0) target = $region37
    $region36: #{rotary_mha.1} parent=1 // pred_region
      %634 = dma.done [#allocation3], 256
    $region37: #{rotary_mha.1} parent=1 // pred_fallthru
      _
    %635 = vsyncpa [#allocation3], 1

</llo_original>
